<compile_context>
chip_gen: v5e
topology: v5e:2x2
jax: 0.10.0
libtpu: 0.0.40
codegen_flags: <defaults>
</compile_context>

<pallas_src>
import jax
import jax.numpy as jnp
from jax.experimental import pallas as pl
from jax.experimental.pallas import tpu as pltpu


def memcell_seq_kernel(x_ref, state0_ref, kkvb_ref, cand_rhs_ref, mask_ref,
                       out_ref):
    """One recurrence step per grid index t; out_ref is the resident state."""
    t = pl.program_id(0)

    @pl.when(t == 0)
    def _():
        out_ref[...] = state0_ref[...]

    s = out_ref[...]                 # (B, J*E) current state, lane-dense
    x_t = x_ref[...]                 # (B, J*E) x replicated per block (wrapper tile)
    k = kkvb_ref[0:1, :]             # (1, J*E) keys flattened
    kvb = kkvb_ref[1:2, :]           # (1, J*E) key_j @ V^T + bias (loop-invariant)
    mask = mask_ref[...]             # (J*E, J*E) 0/1 block mask

    # gate_j = sigmoid(sum_e x*(s_j + k_j)).  The 0/1 block-mask matmul does the
    # segmented reduction AND broadcasts it back across each block's E lanes,
    # keeping everything lane-dense (no in-kernel reshapes).
    # NOTE: if E/J grow and 1e-5 tolerance gets marginal, add
    # precision=jax.lax.Precision.HIGHEST to this dot and the sumsq dot below.
    gl = jnp.dot(x_t * (s + k), mask, preferred_element_type=jnp.float32)
    gate = jax.nn.sigmoid(gl)        # (B, J*E), constant within each block

    # candidate_j = relu(state_j @ U^T + x @ W^T + key_j @ V^T + bias) for all
    # blocks at once: one K=2*J*E matmul against [blockdiag(U^T); blockdiag(W^T)].
    lhs = jnp.concatenate([s, x_t], axis=1)                    # (B, 2*J*E)
    su_xw = jnp.dot(lhs, cand_rhs_ref[...],
                    preferred_element_type=jnp.float32)        # (B, J*E)
    cand = jnp.maximum(su_xw + kvb, 0.0)                       # ReLU activation

    s_next = s + gate * cand                                   # (B, J*E)

    # per-block L2 norm (pre-threshold), broadcast per block via the same mask.
    sumsq = jnp.dot(s_next * s_next, mask, preferred_element_type=jnp.float32)
    # Exact epsilon placement of the reference: ||.|| + 1e-8, then divide.
    norm = jnp.sqrt(sumsq) + 1e-8

    # Threshold(0.0, 1.0): x > 0 ? x : 1.0, then normalize.  Resident state.
    out_ref[...] = jnp.where(s_next > 0.0, s_next, 1.0) / norm


def make_memcell_constants(keys, U_w, V_w, W_w, bias, *, num_blocks, embed_size):
    """Loop-invariant kernel operands.  Build ONCE per weight set (hoisted out
    of the per-step / per-call path)."""
    J, E = num_blocks, embed_size
    JE = J * E
    f32 = jnp.float32
    Ut = U_w.T.astype(f32)           # torch Linear weight is (out, in) -> use W^T
    Vt = V_w.T.astype(f32)
    Wt = W_w.T.astype(f32)
    eye_j = jnp.eye(J, dtype=f32)
    # [blockdiag(U^T); blockdiag(W^T)] -> single K=2*JE candidate matmul.
    cand_rhs = jnp.concatenate(
        [jnp.kron(eye_j, Ut), jnp.kron(eye_j, Wt)], axis=0)            # (2*JE, JE)
    # 0/1 block mask: segmented reduce + broadcast within each block's lanes.
    mask = jnp.kron(eye_j, jnp.ones((E, E), dtype=f32))                # (JE, JE)
    # row 0: keys flattened; row 1: key_j @ V^T + bias  (packed -> one DMA).
    kvb = (keys.astype(f32) @ Vt + bias.astype(f32)[None, :]).reshape(1, JE)
    kkvb = jnp.concatenate([keys.astype(f32).reshape(1, JE), kvb], axis=0)  # (2, JE)
    return {"cand_rhs": cand_rhs, "mask": mask, "kkvb": kkvb}


@jax.jit
def memcell_forward_sequence(xs, state, consts):
    """Run T recurrence steps in one pallas_call.
    xs: (T, B, E); state: (B, J*E).  Returns final state (B, J*E)."""
    kkvb = consts["kkvb"]
    cand_rhs = consts["cand_rhs"]
    mask = consts["mask"]
    T, B, E = xs.shape
    JE = kkvb.shape[1]
    J = JE // E
    assert state.shape == (B, JE) and J * E == JE

    f32 = jnp.float32
    # x lane-tiled per block: tiny (1 KiB/step), fuses into x's producer.
    xs_tiled = jnp.tile(xs.astype(f32), (1, 1, J))                     # (T, B, JE)

    out = pl.pallas_call(
        memcell_seq_kernel,
        out_shape=jax.ShapeDtypeStruct((B, JE), f32),
        grid=(T,),
        in_specs=[
            # per-step x (tiled); only input whose block index moves with t.
            pl.BlockSpec((None, B, JE), lambda t: (t, 0, 0)),
            # Loop-invariant operands: constant block index -> DMA'd once.
            pl.BlockSpec((B, JE), lambda t: (0, 0)),        # initial state
            pl.BlockSpec((2, JE), lambda t: (0, 0)),        # [keys; key V^T + bias]
            pl.BlockSpec((2 * JE, JE), lambda t: (0, 0)),   # [blkdiag U^T; blkdiag W^T]
            pl.BlockSpec((JE, JE), lambda t: (0, 0)),       # block reduce/bcast mask
        ],
        # Constant block index across t -> state stays resident in VMEM for the
        # whole recurrence, written back to HBM once at the end.
        out_specs=pl.BlockSpec((B, JE), lambda t: (0, 0)),
        compiler_params=pltpu.CompilerParams(
            dimension_semantics=("arbitrary",)),            # sequential recurrence
    )(xs_tiled, state.astype(f32), kkvb, cand_rhs, mask)
    return out


def memcell_forward(x, state, consts):
    """Single MemCell.forward step (matches the PyTorch module): x (B,E)."""
    return memcell_forward_sequence(x[None], state, consts)


def _reference_step(x, state, keys, U_w, V_w, W_w, bias, *, num_blocks,
                    embed_size):
    """Pure-JAX reference mirroring the PyTorch forward, for sanity checking."""
    E = embed_size
    outs = []
    for j in range(num_blocks):
        s = state[:, j * E:(j + 1) * E]
        k = keys[j][None, :]
        gate = jax.nn.sigmoid(jnp.sum(x * s, axis=1) + jnp.sum(x * k, axis=1))
        cand = jnp.maximum(s @ U_w.T + bias + x @ W_w.T + k @ V_w.T, 0.0)
        s_next = s + gate[:, None] * cand
        norm = jnp.abs(jnp.linalg.norm(s_next, axis=-1, keepdims=True)) + 1e-8
        s_next = jnp.where(s_next > 0.0, s_next, 1.0) / norm
        outs.append(s_next)
    return jnp.concatenate(outs, axis=1)


if __name__ == "__main__":
    B = 2
    num_blocks = 4
    embed_size = 32
    T = 6

    key = jax.random.PRNGKey(0)
    k_x, k_s, k_keys, k_u, k_v, k_w, k_b = jax.random.split(key, 7)

    x = jax.random.normal(k_x, (B, embed_size), dtype=jnp.float32)
    state = jax.random.normal(k_s, (B, num_blocks * embed_size), dtype=jnp.float32)
    keys = jax.random.normal(k_keys, (num_blocks, embed_size), dtype=jnp.float32) * 0.1
    U_w = jax.random.normal(k_u, (embed_size, embed_size), dtype=jnp.float32) * 0.1
    V_w = jax.random.normal(k_v, (embed_size, embed_size), dtype=jnp.float32) * 0.1
    W_w = jax.random.normal(k_w, (embed_size, embed_size), dtype=jnp.float32) * 0.1
    bias = jax.random.normal(k_b, (embed_size,), dtype=jnp.float32) * 0.1

    # Loop-invariant constants built once per weight set (hoisted).
    consts = make_memcell_constants(keys, U_w, V_w, W_w, bias,
                                    num_blocks=num_blocks, embed_size=embed_size)

    # ---- single step: exactly MemCell.forward(x, state) ----
    out1 = jax.block_until_ready(memcell_forward(x, state, consts))
    ref1 = _reference_step(x, state, keys, U_w, V_w, W_w, bias,
                           num_blocks=num_blocks, embed_size=embed_size)
    assert out1.shape == (B, num_blocks * embed_size)
    assert jnp.allclose(out1, ref1, atol=1e-5, rtol=1e-5)

    # ---- T-step recurrence fused into one pallas_call (state resident in VMEM) ----
    xs = jax.random.normal(jax.random.fold_in(key, 123),
                           (T, B, embed_size), dtype=jnp.float32)
    outT = jax.block_until_ready(memcell_forward_sequence(xs, state, consts))
    refT = state
    for t in range(T):
        refT = _reference_step(xs[t], refT, keys, U_w, V_w, W_w, bias,
                               num_blocks=num_blocks, embed_size=embed_size)
    assert outT.shape == (B, num_blocks * embed_size)
    assert jnp.allclose(outT, refT, atol=1e-4, rtol=1e-4)

    print("KERNEL_OK")
</pallas_src>

<mosaic_0001>
module attributes {stable_mosaic.version = 11 : i64} {
  func.func @memcell_seq_kernel(%arg0: i32, %arg1: memref<1x2x128xf32, #tpu.memory_space<vmem>>, %arg2: memref<2x128xf32, #tpu.memory_space<vmem>>, %arg3: memref<2x128xf32, #tpu.memory_space<vmem>>, %arg4: memref<256x128xf32, #tpu.memory_space<vmem>>, %arg5: memref<128x128xf32, #tpu.memory_space<vmem>>, %arg6: memref<2x128xf32, #tpu.memory_space<vmem>>) attributes {dimension_semantics = [#tpu.dimension_semantics<arbitrary>], iteration_bounds = array<i64: 1>, scalar_prefetch = 0 : i64, scratch_operands = 0 : i64, tpu.core_type = #tpu.core_type<tc>, window_params = [{transform_indices = @transform_0, window_bounds = array<i64: 1, 2, 128>}, {pipeline_mode = #tpu.pipeline_mode<synchronous>, transform_indices = @transform_1, window_bounds = array<i64: 2, 128>}, {pipeline_mode = #tpu.pipeline_mode<synchronous>, transform_indices = @transform_2, window_bounds = array<i64: 2, 128>}, {pipeline_mode = #tpu.pipeline_mode<synchronous>, transform_indices = @transform_3, window_bounds = array<i64: 256, 128>}, {pipeline_mode = #tpu.pipeline_mode<synchronous>, transform_indices = @transform_4, window_bounds = array<i64: 128, 128>}, {pipeline_mode = #tpu.pipeline_mode<synchronous>, transform_indices = @transform_5, window_bounds = array<i64: 2, 128>}]} {
    %c0_i32 = arith.constant 0 : i32
    %0 = arith.cmpi eq, %arg0, %c0_i32 : i32
    %1 = arith.extui %0 : i1 to i32
    %c0_i32_0 = arith.constant 0 : i32
    %2 = arith.cmpi ne, %1, %c0_i32_0 : i32
    scf.if %2 {
      %c0_21 = arith.constant 0 : index
      %c0_22 = arith.constant 0 : index
      %38 = vector.load %arg2[%c0_21, %c0_22] : memref<2x128xf32, #tpu.memory_space<vmem>>, vector<2x128xf32>
      %c0_23 = arith.constant 0 : index
      %c0_24 = arith.constant 0 : index
      %39 = vector.load %arg6[%c0_23, %c0_24] : memref<2x128xf32, #tpu.memory_space<vmem>>, vector<2x128xf32>
      tpu.vector_store %arg6[%c0_23, %c0_24], %38 {strides = array<i32>} : memref<2x128xf32, #tpu.memory_space<vmem>>, vector<2x128xf32>,
    } else {
    }
    %c0 = arith.constant 0 : index
    %c0_1 = arith.constant 0 : index
    %3 = vector.load %arg6[%c0, %c0_1] : memref<2x128xf32, #tpu.memory_space<vmem>>, vector<2x128xf32>
    %c0_2 = arith.constant 0 : index
    %c0_3 = arith.constant 0 : index
    %c0_4 = arith.constant 0 : index
    %4 = vector.load %arg1[%c0_2, %c0_3, %c0_4] : memref<1x2x128xf32, #tpu.memory_space<vmem>>, vector<1x2x128xf32>
    %5 = vector.shape_cast %4 : vector<1x2x128xf32> to vector<2x128xf32>
    %c0_5 = arith.constant 0 : index
    %c0_6 = arith.constant 0 : index
    %6 = vector.load %arg3[%c0_5, %c0_6] : memref<2x128xf32, #tpu.memory_space<vmem>>, vector<1x128xf32>
    %c1 = arith.constant 1 : index
    %c0_7 = arith.constant 0 : index
    %7 = vector.load %arg3[%c1, %c0_7] : memref<2x128xf32, #tpu.memory_space<vmem>>, vector<1x128xf32>
    %c0_8 = arith.constant 0 : index
    %c0_9 = arith.constant 0 : index
    %8 = vector.load %arg5[%c0_8, %c0_9] : memref<128x128xf32, #tpu.memory_space<vmem>>, vector<128x128xf32>
    %9 = vector.broadcast %6 : vector<1x128xf32> to vector<2x128xf32>
    %10 = arith.addf %3, %9 : vector<2x128xf32>
    %11 = arith.mulf %5, %10 : vector<2x128xf32>
    %cst = arith.constant dense<0.000000e+00> : vector<2x128xf32>
    %12 = tpu.matmul %11, %8, %cst {dimension_numbers = #tpu.dot_dimension_numbers<[1], [0], [0], [1], [0, 0, 1, 1], [], []>} : vector<2x128xf32>, vector<128x128xf32>, vector<2x128xf32> -> vector<2x128xf32>
    %13 = arith.negf %12 : vector<2x128xf32>
    %14 = math.exp %13 : vector<2x128xf32>
    %cst_10 = arith.constant 1.000000e+00 : f32
    %15 = vector.broadcast %cst_10 : f32 to vector<2x128xf32>
    %16 = arith.addf %15, %14 : vector<2x128xf32>
    %17 = arith.divf %15, %16 : vector<2x128xf32>
    %18 = tpu.concatenate %3, %5 in 1 : vector<2x128xf32>, vector<2x128xf32> -> vector<2x256xf32>
    %c0_11 = arith.constant 0 : index
    %c0_12 = arith.constant 0 : index
    %19 = vector.load %arg4[%c0_11, %c0_12] : memref<256x128xf32, #tpu.memory_space<vmem>>, vector<256x128xf32>
    %cst_13 = arith.constant dense<0.000000e+00> : vector<2x128xf32>
    %20 = tpu.matmul %18, %19, %cst_13 {dimension_numbers = #tpu.dot_dimension_numbers<[1], [0], [0], [1], [0, 0, 1, 1], [], []>} : vector<2x256xf32>, vector<256x128xf32>, vector<2x128xf32> -> vector<2x128xf32>
    %21 = vector.broadcast %7 : vector<1x128xf32> to vector<2x128xf32>
    %22 = arith.addf %20, %21 : vector<2x128xf32>
    %cst_14 = arith.constant 0.000000e+00 : f32
    %23 = vector.broadcast %cst_14 : f32 to vector<2x128xf32>
    %24 = arith.maximumf %22, %23 : vector<2x128xf32>
    %25 = arith.mulf %17, %24 : vector<2x128xf32>
    %26 = arith.addf %3, %25 : vector<2x128xf32>
    %27 = arith.mulf %26, %26 : vector<2x128xf32>
    %cst_15 = arith.constant dense<0.000000e+00> : vector<2x128xf32>
    %28 = tpu.matmul %27, %8, %cst_15 {dimension_numbers = #tpu.dot_dimension_numbers<[1], [0], [0], [1], [0, 0, 1, 1], [], []>} : vector<2x128xf32>, vector<128x128xf32>, vector<2x128xf32> -> vector<2x128xf32>
    %29 = math.sqrt %28 : vector<2x128xf32>
    %cst_16 = arith.constant 9.99999993E-9 : f32
    %30 = vector.broadcast %cst_16 : f32 to vector<2x128xf32>
    %31 = arith.addf %29, %30 : vector<2x128xf32>
    %cst_17 = arith.constant 0.000000e+00 : f32
    %32 = vector.broadcast %cst_17 : f32 to vector<2x128xf32>
    %33 = arith.cmpf ogt, %26, %32 : vector<2x128xf32>
    %cst_18 = arith.constant 1.000000e+00 : f32
    %34 = vector.broadcast %cst_18 : f32 to vector<2x128xf32>
    %35 = arith.select %33, %26, %34 : vector<2x128xi1>, vector<2x128xf32>
    %36 = arith.divf %35, %31 : vector<2x128xf32>
    %c0_19 = arith.constant 0 : index
    %c0_20 = arith.constant 0 : index
    %37 = vector.load %arg6[%c0_19, %c0_20] : memref<2x128xf32, #tpu.memory_space<vmem>>, vector<2x128xf32>
    tpu.vector_store %arg6[%c0_19, %c0_20], %36 {strides = array<i32>} : memref<2x128xf32, #tpu.memory_space<vmem>>, vector<2x128xf32>,
    return
  }
  func.func @transform_0(%arg0: i32) -> (i32, i32, i32) {
    %c0_i32 = arith.constant 0 : i32
    %c0_i32_0 = arith.constant 0 : i32
    %c0_i32_1 = arith.constant 0 : i32
    return %arg0, %c0_i32, %c0_i32_0 : i32, i32, i32
  }
  func.func @transform_1(%arg0: i32) -> (i32, i32) {
    %c0_i32 = arith.constant 0 : i32
    %c0_i32_0 = arith.constant 0 : i32
    %c0_i32_1 = arith.constant 0 : i32
    return %c0_i32, %c0_i32_0 : i32, i32
  }
  func.func @transform_2(%arg0: i32) -> (i32, i32) {
    %c0_i32 = arith.constant 0 : i32
    %c0_i32_0 = arith.constant 0 : i32
    %c0_i32_1 = arith.constant 0 : i32
    return %c0_i32, %c0_i32_0 : i32, i32
  }
  func.func @transform_3(%arg0: i32) -> (i32, i32) {
    %c0_i32 = arith.constant 0 : i32
    %c0_i32_0 = arith.constant 0 : i32
    %c0_i32_1 = arith.constant 0 : i32
    return %c0_i32, %c0_i32_0 : i32, i32
  }
  func.func @transform_4(%arg0: i32) -> (i32, i32) {
    %c0_i32 = arith.constant 0 : i32
    %c0_i32_0 = arith.constant 0 : i32
    %c0_i32_1 = arith.constant 0 : i32
    return %c0_i32, %c0_i32_0 : i32, i32
  }
  func.func @transform_5(%arg0: i32) -> (i32, i32) {
    %c0_i32 = arith.constant 0 : i32
    %c0_i32_0 = arith.constant 0 : i32
    %c0_i32_1 = arith.constant 0 : i32
    return %c0_i32, %c0_i32_0 : i32, i32
  }
}

</mosaic_0001>

<llo_original>
// kernel: memcell_forward_sequence.1
$region0: #{memcell_forward_sequence.1}
  #allocation0 [shape = 'u32[]', space=smem, size = 0x4, offset = 0x4, fixed_abs, tag = 'smem constant byte address 0x4 - core index']
  #allocation1 [shape = 'u32[72,128]{1,0:T(1,128)}', space=vmem, size = 0x9000, scoped, tag = 'internal scratch']
  %s0 = inlined_call_operand.vmem [shape: f32[1,2,128], index: 0, kind: input, shape index: {}]
  %s1 = inlined_call_operand.vmem [shape: f32[2,128], index: 1, kind: input, shape index: {}]
  %s2 = inlined_call_operand.vmem [shape: f32[2,128], index: 2, kind: input, shape index: {}]
  %s3 = inlined_call_operand.hbm [shape: f32[256,128], index: 3, kind: input, shape index: {}]
  %s4 = inlined_call_operand.hbm [shape: f32[128,128], index: 4, kind: input, shape index: {}]
  %s5 = inlined_call_operand.hbm [shape: f32[2,128], index: 5, kind: output, shape index: {}]
  %s6 = sld [smem:[#allocation0]]
  $region42: #{memcell_forward_sequence.1} parent=0
    _
  %s8 = ssub.s32 1, %s6
  %s9 = scalar_select 0, %s8, %s6
  $region1: #{memcell_forward_sequence.1} parent=0
    #allocation2 [shape = 'u8[131072]{0}', space=vmem, size = 0x20000, scoped, tag = 'input window, operand 3, single buffered']
    #allocation3 [shape = 's32[1]{0}', space=sflag, size = 0x4, scoped, tag = 'scoped memory for memcell_forward_sequence.1']
    #allocation4 [shape = 's32[1]{0}', space=sflag, size = 0x4, scoped, tag = 'scoped memory for memcell_forward_sequence.1']
    #allocation5 [shape = 'u8[65536]{0}', space=vmem, size = 0x10000, scoped, tag = 'input window, operand 4, single buffered']
    #allocation6 [shape = 's32[1]{0}', space=sflag, size = 0x4, scoped, tag = 'scoped memory for memcell_forward_sequence.1']
    #allocation7 [shape = 'u8[1024]{0}', space=vmem, size = 0x400, scoped, tag = 'output window, operand 0, single buffered']
    %10 = vsyncpa [#allocation3], 0
    %11 = vsyncpa [#allocation6], 0
    %12 = vsyncpa [#allocation4], 0
    // Predicated region
    $region2: #{memcell_forward_sequence.1} parent=1 // pred_check
      _
    $region3: #{memcell_forward_sequence.1} parent=1 // pred_check_branch
      %14 = sbr.rel (0) target = $region5
    $region4: #{memcell_forward_sequence.1} parent=1 // pred_region
      _
    $region5: #{memcell_forward_sequence.1} parent=1 // pred_fallthru
      _
    // Predicated region
    $region6: #{memcell_forward_sequence.1} parent=1 // pred_check
      _
    $region7: #{memcell_forward_sequence.1} parent=1 // pred_check_branch
      %16 = sbr.rel (0) target = $region9
    $region8: #{memcell_forward_sequence.1} parent=1 // pred_region
      _
    $region9: #{memcell_forward_sequence.1} parent=1 // pred_fallthru
      _
    // Predicated region
    $region10: #{memcell_forward_sequence.1} parent=1 // pred_check
      _
    $region11: #{memcell_forward_sequence.1} parent=1 // pred_check_branch
      %18 = sbr.rel (0) target = $region13
    $region12: #{memcell_forward_sequence.1} parent=1 // pred_region
      _
    $region13: #{memcell_forward_sequence.1} parent=1 // pred_fallthru
      _
    // Predicated region
    $region14: #{memcell_forward_sequence.1} parent=1 // pred_check
      _
    $region15: #{memcell_forward_sequence.1} parent=1 // pred_check_branch
      %20 = sbr.rel (0) target = $region17
    $region16: #{memcell_forward_sequence.1} parent=1 // pred_region
      %22 = vsyncadd [#allocation3], 0
      %s23 = sshll.u32 %s3, 4
      %s24 = int_to_ptr.hbm [resolvable:$true] %s23
      %s25 = sshll.u32 [#allocation2], 4
      %s26 = int_to_ptr.vmem [resolvable:$true] %s25
      %31 = dma.hbm_to_vmem [thread:$0]  %s24, 4096, %s26, [#allocation3], 128, 128, 8
    $region17: #{memcell_forward_sequence.1} parent=1 // pred_fallthru
      _
    // Predicated region
    $region18: #{memcell_forward_sequence.1} parent=1 // pred_check
      _
    $region19: #{memcell_forward_sequence.1} parent=1 // pred_check_branch
      %33 = sbr.rel (0) target = $region21
    $region20: #{memcell_forward_sequence.1} parent=1 // pred_region
      %35 = vsyncadd [#allocation6], 0
      %s36 = sshll.u32 %s4, 4
      %s37 = int_to_ptr.hbm [resolvable:$true] %s36
      %s38 = sshll.u32 [#allocation5], 4
      %s39 = int_to_ptr.vmem [resolvable:$true] %s38
      %44 = dma.hbm_to_vmem [thread:$0]  %s37, 2048, %s39, [#allocation6], 128, 128, 8
    $region21: #{memcell_forward_sequence.1} parent=1 // pred_fallthru
      _
    // Predicated region
    $region22: #{memcell_forward_sequence.1} parent=1 // pred_check
      _
    $region23: #{memcell_forward_sequence.1} parent=1 // pred_check_branch
      %46 = sbr.rel (0) target = $region25
    $region24: #{memcell_forward_sequence.1} parent=1 // pred_region
      %48 = dma.done [#allocation3], 4096
    $region25: #{memcell_forward_sequence.1} parent=1 // pred_fallthru
      _
    // Predicated region
    $region26: #{memcell_forward_sequence.1} parent=1 // pred_check
      _
    $region27: #{memcell_forward_sequence.1} parent=1 // pred_check_branch
      %50 = sbr.rel (0) target = $region29
    $region28: #{memcell_forward_sequence.1} parent=1 // pred_region
      %52 = dma.done [#allocation6], 2048
    $region29: #{memcell_forward_sequence.1} parent=1 // pred_fallthru
      _
    %p53 = scmp.eq.s32.totalorder 0, 0
    // Predicated region
    $region30: #{memcell_forward_sequence.1} parent=1 // pred_check
      %p54 = pneg %p53
    $region31: #{memcell_forward_sequence.1} parent=1 // pred_check_branch
      %56 = sbr.rel (%p54) target = $region33
    $region32: #{memcell_forward_sequence.1} parent=1 // pred_region
      %v57 = vld [vmem:[%s1] sm:$0x3]
      %58 = vst [vmem:[#allocation7] sm:$0x3] %v57
    $region33: #{memcell_forward_sequence.1} parent=1 // pred_fallthru
      _
    %v59 = vld [vmem:[#allocation7] sm:$0x3]
    %v60 = vld [vmem:[%s0] sm:$0x3]
    %v61 = vld [vmem:[%s2] sm:$0x1]
    %v62 = vld [vmem:[%s2 + $0x1] sm:$0x1]
    %v63 = vld [vmem:[#allocation5] sm:$0xff]
    %v64 = vld [vmem:[#allocation5 + $0x8] sm:$0xff]
    %v65 = vld [vmem:[#allocation5 + $0x10] sm:$0xff]
    %v66 = vld [vmem:[#allocation5 + $0x18] sm:$0xff]
    %v67 = vld [vmem:[#allocation5 + $0x20] sm:$0xff]
    %v68 = vld [vmem:[#allocation5 + $0x28] sm:$0xff]
    %v69 = vld [vmem:[#allocation5 + $0x30] sm:$0xff]
    %v70 = vld [vmem:[#allocation5 + $0x38] sm:$0xff]
    %v71 = vld [vmem:[#allocation5 + $0x40] sm:$0xff]
    %v72 = vld [vmem:[#allocation5 + $0x48] sm:$0xff]
    %v73 = vld [vmem:[#allocation5 + $0x50] sm:$0xff]
    %v74 = vld [vmem:[#allocation5 + $0x58] sm:$0xff]
    %v75 = vld [vmem:[#allocation5 + $0x60] sm:$0xff]
    %v76 = vld [vmem:[#allocation5 + $0x68] sm:$0xff]
    %v77 = vld [vmem:[#allocation5 + $0x70] sm:$0xff]
    %v78 = vld [vmem:[#allocation5 + $0x78] sm:$0xff]
    %v79 = vperm.slane %v61, 0
    %v80 = vadd.f32 %v59, %v79
    %v81 = vmul.f32 %v60, %v80
    %82 = vmatpush.msra.mxu0 %v78
    %83 = vmatpush.msra.mxu0 %v77
    %84 = vmatpush.msra.mxu0 %v76
    %85 = vmatpush.msra.mxu0 %v75
    %86 = vmatpush.msra.mxu0 %v74
    %87 = vmatpush.msra.mxu0 %v73
    %88 = vmatpush.msra.mxu0 %v72
    %89 = vmatpush.msra.mxu0 %v71
    %90 = vmatpush.msra.mxu0 %v70
    %91 = vmatpush.msra.mxu0 %v69
    %92 = vmatpush.msra.mxu0 %v68
    %93 = vmatpush.msra.mxu0 %v67
    %94 = vmatpush.msra.mxu0 %v66
    %95 = vmatpush.msra.mxu0 %v65
    %96 = vmatpush.msra.mxu0 %v64
    %97 = vmatpush.msra.mxu0 %v63
    %98 = vmatmul.f32.gmra.mxu0 %v81
    %v99 = vpop.f32.mrf.mxu0
    %v100 = vadd.f32 0.0, %v99
    %101 = vdwg.mxu0
    %v102 = vxor.u32 %v100, 2147483648
    %v103 = vmul.f32 %v102, 1.442695
    %v104 = vpow.pop %v103
    %v105 = vadd.f32 %v104, 1.0
    %v106 = vrcp.pop %v105
    %v107 = vmul.f32 %v105, %v106
    %v108 = vsub.f32 1.0, %v107
    %v109 = vmul.f32 %v106, %v108
    %v110 = vadd.f32 %v106, %v109
    %vm111 = vweird.f32 %v105
    %vm112 = vweird.f32 %v106
    %vm113 = vmor %vm111, %vm112
    %v114 = vsel %vm113, %v106, %v110
    %v115 = vand.u32 2147483647, %v105
    %vm116 = vcmp.eq.f32.partialorder %v115, 8.507059e+37
    %v117 = vand.u32 %v105, 2147483648
    %v118 = vor.u32 1.1754944e-38, %v117
    %v119 = vsel %vm116, %v118, %v114
    %v120 = vmul.f32 1.0, %v119
    %v121 = vld [vmem:[#allocation2] sm:$0xff]
    %v122 = vld [vmem:[#allocation2 + $0x8] sm:$0xff]
    %v123 = vld [vmem:[#allocation2 + $0x10] sm:$0xff]
    %v124 = vld [vmem:[#allocation2 + $0x18] sm:$0xff]
    %v125 = vld [vmem:[#allocation2 + $0x20] sm:$0xff]
    %v126 = vld [vmem:[#allocation2 + $0x28] sm:$0xff]
    %v127 = vld [vmem:[#allocation2 + $0x30] sm:$0xff]
    %v128 = vld [vmem:[#allocation2 + $0x38] sm:$0xff]
    %v129 = vld [vmem:[#allocation2 + $0x40] sm:$0xff]
    %v130 = vld [vmem:[#allocation2 + $0x48] sm:$0xff]
    %v131 = vld [vmem:[#allocation2 + $0x50] sm:$0xff]
    %v132 = vld [vmem:[#allocation2 + $0x58] sm:$0xff]
    %v133 = vld [vmem:[#allocation2 + $0x60] sm:$0xff]
    %v134 = vld [vmem:[#allocation2 + $0x68] sm:$0xff]
    %v135 = vld [vmem:[#allocation2 + $0x70] sm:$0xff]
    %v136 = vld [vmem:[#allocation2 + $0x78] sm:$0xff]
    %v137 = vld [vmem:[#allocation2 + $0x80] sm:$0xff]
    %v138 = vld [vmem:[#allocation2 + $0x88] sm:$0xff]
    %v139 = vld [vmem:[#allocation2 + $0x90] sm:$0xff]
    %v140 = vld [vmem:[#allocation2 + $0x98] sm:$0xff]
    %v141 = vld [vmem:[#allocation2 + $0xa0] sm:$0xff]
    %v142 = vld [vmem:[#allocation2 + $0xa8] sm:$0xff]
    %v143 = vld [vmem:[#allocation2 + $0xb0] sm:$0xff]
    %v144 = vld [vmem:[#allocation2 + $0xb8] sm:$0xff]
    %v145 = vld [vmem:[#allocation2 + $0xc0] sm:$0xff]
    %v146 = vld [vmem:[#allocation2 + $0xc8] sm:$0xff]
    %v147 = vld [vmem:[#allocation2 + $0xd0] sm:$0xff]
    %v148 = vld [vmem:[#allocation2 + $0xd8] sm:$0xff]
    %v149 = vld [vmem:[#allocation2 + $0xe0] sm:$0xff]
    %v150 = vld [vmem:[#allocation2 + $0xe8] sm:$0xff]
    %v151 = vld [vmem:[#allocation2 + $0xf0] sm:$0xff]
    %v152 = vld [vmem:[#allocation2 + $0xf8] sm:$0xff]
    %v153 = vperm.slane %v62, 0
    %154 = vmatpush.msra.mxu0 %v136
    %155 = vmatpush.msra.mxu0 %v135
    %156 = vmatpush.msra.mxu0 %v134
    %157 = vmatpush.msra.mxu0 %v133
    %158 = vmatpush.msra.mxu0 %v132
    %159 = vmatpush.msra.mxu0 %v131
    %160 = vmatpush.msra.mxu0 %v130
    %161 = vmatpush.msra.mxu0 %v129
    %162 = vmatpush.msra.mxu0 %v128
    %163 = vmatpush.msra.mxu0 %v127
    %164 = vmatpush.msra.mxu0 %v126
    %165 = vmatpush.msra.mxu0 %v125
    %166 = vmatpush.msra.mxu0 %v124
    %167 = vmatpush.msra.mxu0 %v123
    %168 = vmatpush.msra.mxu0 %v122
    %169 = vmatpush.msra.mxu0 %v121
    %170 = vmatmul.f32.gmra.mxu0 %v59
    %v171 = vpop.f32.mrf.mxu0
    %v172 = vadd.f32 %v153, %v171
    %173 = vdwg.mxu0
    %174 = vmatpush.msra.mxu0 %v152
    %175 = vmatpush.msra.mxu0 %v151
    %176 = vmatpush.msra.mxu0 %v150
    %177 = vmatpush.msra.mxu0 %v149
    %178 = vmatpush.msra.mxu0 %v148
    %179 = vmatpush.msra.mxu0 %v147
    %180 = vmatpush.msra.mxu0 %v146
    %181 = vmatpush.msra.mxu0 %v145
    %182 = vmatpush.msra.mxu0 %v144
    %183 = vmatpush.msra.mxu0 %v143
    %184 = vmatpush.msra.mxu0 %v142
    %185 = vmatpush.msra.mxu0 %v141
    %186 = vmatpush.msra.mxu0 %v140
    %187 = vmatpush.msra.mxu0 %v139
    %188 = vmatpush.msra.mxu0 %v138
    %189 = vmatpush.msra.mxu0 %v137
    %190 = vmatmul.f32.gmra.mxu0 %v60
    %v191 = vpop.f32.mrf.mxu0
    %v192 = vadd.f32 %v172, %v191
    %193 = vdwg.mxu0
    %v194 = vmax.f32 %v192, 0.0
    %v195 = vmul.f32 %v120, %v194
    %v196 = vadd.f32 %v59, %v195
    %v197 = vmul.f32 %v196, %v196
    %198 = vmatpush.msra.mxu0 %v78
    %199 = vmatpush.msra.mxu0 %v77
    %200 = vmatpush.msra.mxu0 %v76
    %201 = vmatpush.msra.mxu0 %v75
    %202 = vmatpush.msra.mxu0 %v74
    %203 = vmatpush.msra.mxu0 %v73
    %204 = vmatpush.msra.mxu0 %v72
    %205 = vmatpush.msra.mxu0 %v71
    %206 = vmatpush.msra.mxu0 %v70
    %207 = vmatpush.msra.mxu0 %v69
    %208 = vmatpush.msra.mxu0 %v68
    %209 = vmatpush.msra.mxu0 %v67
    %210 = vmatpush.msra.mxu0 %v66
    %211 = vmatpush.msra.mxu0 %v65
    %212 = vmatpush.msra.mxu0 %v64
    %213 = vmatpush.msra.mxu0 %v63
    %214 = vmatmul.f32.gmra.mxu0 %v197
    %v215 = vpop.f32.mrf.mxu0
    %v216 = vadd.f32 0.0, %v215
    %217 = vdwg.mxu0
    %v218 = vrsqrt.pop %v216
    %v219 = vmul.f32 %v218, %v216
    %v220 = vmul.f32 %v219, %v218
    %v221 = vmul.f32 0.5, %v220
    %v222 = vsub.f32 1.5, %v221
    %v223 = vmul.f32 %v218, %v222
    %v224 = vmul.f32 %v216, %v223
    %vm225 = vcmp.eq.f32.partialorder %v216, inf
    %v226 = vsel %vm225, %v216, %v224
    %vm227 = vcmp.eq.f32.partialorder %v216, 0.0
    %v228 = vand.u32 %v216, 2147483648
    %v229 = vsel %vm227, %v228, %v226
    %v230 = vadd.f32 %v229, 1e-08
    %vm231 = vcmp.gt.f32.partialorder %v196, 0.0
    %v232 = vsel %vm231, %v196, 1.0
    %v233 = vrcp.pop %v230
    %v234 = vmul.f32 %v230, %v233
    %v235 = vsub.f32 1.0, %v234
    %v236 = vmul.f32 %v233, %v235
    %v237 = vadd.f32 %v233, %v236
    %vm238 = vweird.f32 %v230
    %vm239 = vweird.f32 %v233
    %vm240 = vmor %vm238, %vm239
    %v241 = vsel %vm240, %v233, %v237
    %v242 = vand.u32 2147483647, %v230
    %vm243 = vcmp.eq.f32.partialorder %v242, 8.507059e+37
    %v244 = vand.u32 %v230, 2147483648
    %v245 = vor.u32 1.1754944e-38, %v244
    %v246 = vsel %vm243, %v245, %v241
    %v247 = vmul.f32 %v232, %v246
    %248 = vst [vmem:[#allocation7] sm:$0x3] %v247
    // Predicated region
    $region34: #{memcell_forward_sequence.1} parent=1 // pred_check
      _
    $region35: #{memcell_forward_sequence.1} parent=1 // pred_check_branch
      %250 = sbr.rel (0) target = $region37
    $region36: #{memcell_forward_sequence.1} parent=1 // pred_region
      %252 = vsyncadd [#allocation4], 0
      %s254 = sshll.u32 [#allocation7], 4
      %s255 = int_to_ptr.vmem [resolvable:$true] %s254
      %s256 = sshll.u32 %s5, 4
      %s257 = int_to_ptr.hbm [resolvable:$true] %s256
      %259 = dma.vmem_to_hbm [thread:$0]  %s255, 32, %s257, [#allocation4]
    $region37: #{memcell_forward_sequence.1} parent=1 // pred_fallthru
      _
    // Predicated region
    $region38: #{memcell_forward_sequence.1} parent=1 // pred_check
      _
    $region39: #{memcell_forward_sequence.1} parent=1 // pred_check_branch
      %261 = sbr.rel (0) target = $region41
    $region40: #{memcell_forward_sequence.1} parent=1 // pred_region
      %263 = dma.done [#allocation4], 32
    $region41: #{memcell_forward_sequence.1} parent=1 // pred_fallthru
      _
    %264 = vsyncpa [#allocation3], 1
    %265 = vsyncpa [#allocation6], 1
    %266 = vsyncpa [#allocation4], 1

</llo_original>
